<compile_context>
chip_gen: v7x
topology: tpu7x:2x2x1
jax: 0.10.0
libtpu: 0.0.40
codegen_flags: <defaults>
</compile_context>

<pallas_src>
import functools

import jax
import jax.numpy as jnp
from jax.experimental import pallas as pl
from jax.experimental.pallas import tpu as pltpu

ALPH = 50.0
BETA = 100.0
SZ = 11        # number of heatmap channels used by relationPosi
TOPK = 5

_TARGET_BLOCK_BYTES = 2 << 20          # ~2 MiB per input block, in INPUT dtype bytes
_VMEM_LIMIT_FLOOR = 32 << 20
_VMEM_LIMIT_CAP = 48 << 20             # leaves headroom even on v7x (64 MiB/TC)


def _round_up(x, m):
    return (x + m - 1) // m * m


def _choose_tiles(n, c, hw, itemsize, block_bytes):
    """Pick (tn, thw).  thw first (contiguity), then tn as a divisor of n."""
    c_pad = _round_up(c, 16)                     # worst-case sublane padding (bf16 tile)
    budget = max(block_bytes // itemsize, 128 * c_pad)   # elements per input block
    if c_pad * hw <= budget:
        thw = hw                                 # full HW row: longest contiguous DMA
    else:
        thw = max(128, (budget // c_pad) // 128 * 128)
    tn = 1
    for cand in range(max(1, min(n, budget // (c_pad * thw))), 0, -1):
        if n % cand == 0:                        # tn | n  =>  no batch padding needed
            tn = cand
            break
    return tn, thw


def _posi_kernel(pred_ref, gt_ref, acc_ref, *, sz, thw, hw, hw_inner, mask_hw):
    """One (tn, C, thw) tile of pred/gt.

    acc_ref block: (3, 1, tn, C), resident across the hw_inner ("arbitrary") axis.
      plane 0, cols [0:C)      : sum_hw (pred - gt)^2          per (n, channel)
      plane 1, cols [0:sz-1)   : sum_hw (pred[c] - pred[c+1])^2
      plane 2, cols [0:sz-1)   : sum_hw (gt[c]   - gt[c+1])^2
    """
    hi = pl.program_id(2)

    @pl.when(hi == 0)
    def _init():
        acc_ref[...] = jnp.zeros_like(acc_ref)

    # Upcast on the loaded tile — inputs stay in their HBM dtype.
    p = pred_ref[...].astype(jnp.float32)        # (tn, C, thw)
    g = gt_ref[...].astype(jnp.float32)

    if mask_hw:
        # Ragged last HW tile: zero the out-of-range lanes instead of padding
        # the tensors in HBM.  (Out-of-bounds input lanes are unspecified; the
        # select keeps them out of every sum.)
        ho = pl.program_id(1)
        start = (ho * hw_inner + hi) * thw
        lane = jax.lax.broadcasted_iota(jnp.int32, p.shape, 2)
        valid = (start + lane) < hw
        p = jnp.where(valid, p, 0.0)
        g = jnp.where(valid, g, 0.0)

    d = p - g
    acc_ref[0, 0, :, :] += jnp.sum(d * d, axis=-1)             # (tn, C)

    # Adjacent-channel squared diffs, only for the SZ channels the loss uses.
    ps = p[:, :sz, :]
    gs = g[:, :sz, :]
    dp = ps[:, :-1, :] - ps[:, 1:, :]                          # (tn, sz-1, thw)
    dg = gs[:, :-1, :] - gs[:, 1:, :]
    acc_ref[1, 0, :, :sz - 1] += jnp.sum(dp * dp, axis=-1)     # (tn, sz-1)
    acc_ref[2, 0, :, :sz - 1] += jnp.sum(dg * dg, axis=-1)


def posi_loss(pred, gt, alph=ALPH, beta=BETA, block_bytes=None):
    n, c, h, w = pred.shape
    assert gt.shape == pred.shape
    assert c >= SZ, "posiLoss requires at least SZ=11 heatmap channels"
    hw = h * w
    itemsize = jnp.dtype(pred.dtype).itemsize
    if block_bytes is None:
        block_bytes = _TARGET_BLOCK_BYTES

    tn, thw = _choose_tiles(n, c, hw, itemsize, block_bytes)
    n_grid = n // tn
    hw_grid = pl.cdiv(hw, thw)
    mask_hw = (hw % thw) != 0

    # Small-batch megacore (v7x): split the HW reduction into a "parallel"
    # outer half and an "arbitrary" inner half; partials are summed in glue.
    if n_grid == 1 and hw_grid >= 2 and hw_grid % 2 == 0:
        hw_outer, hw_inner = 2, hw_grid // 2
    else:
        hw_outer, hw_inner = 1, hw_grid

    pred3 = pred.reshape(n, c, hw)     # metadata reshape only — no HBM copy
    gt3 = gt.reshape(n, c, hw)

    # Explicit VMEM accounting: 2 inputs x 2 pipeline buffers + ~8 block-sized
    # f32 temporaries (p, g, d, shifted slices, dp, dg) + slack.
    c_pad = _round_up(c, 16)
    block_in = tn * c_pad * thw * itemsize
    block_f32 = tn * c_pad * thw * 4
    vmem_limit = 4 * block_in + 8 * block_f32 + (2 << 20)
    vmem_limit = int(min(_VMEM_LIMIT_CAP, max(_VMEM_LIMIT_FLOOR, vmem_limit)))

    kernel = functools.partial(_posi_kernel, sz=SZ, thw=thw, hw=hw,
                               hw_inner=hw_inner, mask_hw=mask_hw)

    cost = pl.CostEstimate(
        flops=9 * n * c * hw,
        transcendentals=0,
        bytes_accessed=2 * n * c * hw * itemsize + 3 * n * c * 4)

    acc = pl.pallas_call(
        kernel,
        grid=(n_grid, hw_outer, hw_inner),
        in_specs=[
            pl.BlockSpec((tn, c, thw),
                         lambda ni, ho, hi: (ni, 0, ho * hw_inner + hi)),
            pl.BlockSpec((tn, c, thw),
                         lambda ni, ho, hi: (ni, 0, ho * hw_inner + hi)),
        ],
        out_specs=pl.BlockSpec((3, 1, tn, c),
                               lambda ni, ho, hi: (0, ni * hw_outer + ho, 0, 0)),
        out_shape=jax.ShapeDtypeStruct((3, n_grid * hw_outer, tn, c), jnp.float32),
        compiler_params=pltpu.CompilerParams(
            dimension_semantics=("parallel", "parallel", "arbitrary"),
            vmem_limit_bytes=vmem_limit),
        cost_estimate=cost,
    )(pred3, gt3)

    # ---------------- glue: O(N * 11) scalar work in plain JAX ----------------
    acc = acc.reshape(3, n_grid, hw_outer, tn, c).sum(axis=2)    # (3, n_grid, tn, c)
    acc = acc.reshape(3, n, c)
    err = acc[0]                          # (N, C)   sum_hw (pred - gt)^2
    d_pred = acc[1][:, :SZ - 1]           # (N, 10)  sum_hw adjacent-channel diffs
    d_gt = acc[2][:, :SZ - 1]

    mse_loss = jnp.sum(err) / (n * c * hw)        # nn.MSELoss over full NCHW

    mse_adj_pred = d_pred / hw            # MSE(hm[j], hm[j+1]) per batch element
    mse_adj_gt = d_gt / hw

    def relation(dm):
        # rel[0]=d[0]; rel[i]=(d[i-1]+d[i])/2 for 1<=i<=9; rel[10]=d[9]
        return jnp.concatenate(
            [dm[:, :1], 0.5 * (dm[:, :-1] + dm[:, 1:]), dm[:, -1:]], axis=1)

    rel_diff = jnp.abs(relation(mse_adj_pred) - relation(mse_adj_gt))   # (N, 11)
    topk_vals, _ = jax.lax.top_k(rel_diff, TOPK)
    posi = jnp.mean(jnp.sum(topk_vals, axis=-1))

    return alph * mse_loss + beta * posi


def _posi_loss_ref(pred, gt, alph=ALPH, beta=BETA):
    """Pure-JAX reference (mirrors the PyTorch module) for self-checking."""
    n, c, h, w = pred.shape
    pred = pred.astype(jnp.float32).reshape(n, c, h * w)
    gt = gt.astype(jnp.float32).reshape(n, c, h * w)
    mse = jnp.mean((pred - gt) ** 2)
    d_pred = jnp.mean((pred[:, :SZ - 1] - pred[:, 1:SZ]) ** 2, axis=-1)
    d_gt = jnp.mean((gt[:, :SZ - 1] - gt[:, 1:SZ]) ** 2, axis=-1)

    def relation(dm):
        return jnp.concatenate(
            [dm[:, :1], 0.5 * (dm[:, :-1] + dm[:, 1:]), dm[:, -1:]], axis=1)

    rel_diff = jnp.abs(relation(d_pred) - relation(d_gt))
    topk_vals, _ = jax.lax.top_k(rel_diff, TOPK)
    posi = jnp.mean(jnp.sum(topk_vals, axis=-1))
    return alph * mse + beta * posi


if __name__ == "__main__":
    key = jax.random.PRNGKey(0)

    # (shape, dtype, forced block_bytes)  — case 2 forces a tiny block budget so
    # the ragged-HW masking, multi-step accumulation and the hw_outer split are
    # all exercised; case 3 checks the in-kernel bf16 -> f32 upcast path.
    cases = [
        ((2, SZ, 16, 16), jnp.float32, None),
        ((1, 12, 48, 31), jnp.float32, 64 * 1024),
        ((2, SZ, 16, 16), jnp.bfloat16, None),
    ]

    for idx, (shape, dtype, blk) in enumerate(cases):
        k1, k2 = jax.random.split(jax.random.fold_in(key, idx))
        pred = jax.random.normal(k1, shape, dtype=jnp.float32).astype(dtype)
        gt = jax.random.normal(k2, shape, dtype=jnp.float32).astype(dtype)

        fn = jax.jit(functools.partial(posi_loss, block_bytes=blk))
        out = fn(pred, gt)
        jax.block_until_ready(out)

        ref = _posi_loss_ref(pred, gt)
        assert jnp.allclose(out, ref, rtol=2e-3, atol=1e-4), (shape, dtype, out, ref)

    print("KERNEL_OK")
</pallas_src>

<mosaic_0001>
module attributes {stable_mosaic.version = 11 : i64} {
  func.func @_posi_kernel(%arg0: i32, %arg1: i32, %arg2: i32, %arg3: memref<2x11x256xf32, #tpu.memory_space<vmem>>, %arg4: memref<2x11x256xf32, #tpu.memory_space<vmem>>, %arg5: memref<3x1x2x11xf32, #tpu.memory_space<vmem>>) attributes {dimension_semantics = [#tpu.dimension_semantics<parallel>, #tpu.dimension_semantics<parallel>, #tpu.dimension_semantics<arbitrary>], iteration_bounds = array<i64: 1, 1, 1>, scalar_prefetch = 0 : i64, scratch_operands = 0 : i64, tpu.core_type = #tpu.core_type<tc>, window_params = [{transform_indices = @transform_0, window_bounds = array<i64: 2, 11, 256>}, {transform_indices = @transform_1, window_bounds = array<i64: 2, 11, 256>}, {transform_indices = @transform_2, window_bounds = array<i64: 3, 1, 2, 11>}]} {
    %c0_i32 = arith.constant 0 : i32
    %0 = arith.cmpi eq, %arg2, %c0_i32 : i32
    %1 = arith.extui %0 : i1 to i32
    %c0_i32_0 = arith.constant 0 : i32
    %2 = arith.cmpi ne, %1, %c0_i32_0 : i32
    scf.if %2 {
      %cst_30 = arith.constant 0.000000e+00 : f32
      %36 = vector.broadcast %cst_30 : f32 to vector<3x1x2x11xf32>
      %c0_31 = arith.constant 0 : index
      %c0_32 = arith.constant 0 : index
      %c0_33 = arith.constant 0 : index
      %c0_34 = arith.constant 0 : index
      %37 = vector.load %arg5[%c0_31, %c0_32, %c0_33, %c0_34] : memref<3x1x2x11xf32, #tpu.memory_space<vmem>>, vector<3x1x2x11xf32>
      tpu.vector_store %arg5[%c0_31, %c0_32, %c0_33, %c0_34], %36 {strides = array<i32>} : memref<3x1x2x11xf32, #tpu.memory_space<vmem>>, vector<3x1x2x11xf32>,
    } else {
    }
    %c0 = arith.constant 0 : index
    %c0_1 = arith.constant 0 : index
    %c0_2 = arith.constant 0 : index
    %3 = vector.load %arg3[%c0, %c0_1, %c0_2] : memref<2x11x256xf32, #tpu.memory_space<vmem>>, vector<2x11x256xf32>
    %c0_3 = arith.constant 0 : index
    %c0_4 = arith.constant 0 : index
    %c0_5 = arith.constant 0 : index
    %4 = vector.load %arg4[%c0_3, %c0_4, %c0_5] : memref<2x11x256xf32, #tpu.memory_space<vmem>>, vector<2x11x256xf32>
    %5 = arith.subf %3, %4 : vector<2x11x256xf32>
    %c0_6 = arith.constant 0 : index
    %c0_7 = arith.constant 0 : index
    %c0_8 = arith.constant 0 : index
    %c0_9 = arith.constant 0 : index
    %6 = vector.load %arg5[%c0_6, %c0_7, %c0_8, %c0_9] : memref<3x1x2x11xf32, #tpu.memory_space<vmem>>, vector<1x1x2x11xf32>
    %7 = vector.shape_cast %6 : vector<1x1x2x11xf32> to vector<2x11xf32>
    %8 = arith.mulf %5, %5 : vector<2x11x256xf32>
    %cst = arith.constant dense<0.000000e+00> : vector<2x11xf32>
    %9 = vector.multi_reduction <add>, %8, %cst [2] : vector<2x11x256xf32> to vector<2x11xf32>
    %10 = arith.addf %7, %9 : vector<2x11xf32>
    %c0_10 = arith.constant 0 : index
    %c0_11 = arith.constant 0 : index
    %c0_12 = arith.constant 0 : index
    %c0_13 = arith.constant 0 : index
    %11 = vector.load %arg5[%c0_10, %c0_11, %c0_12, %c0_13] : memref<3x1x2x11xf32, #tpu.memory_space<vmem>>, vector<1x1x2x11xf32>
    %12 = vector.shape_cast %11 : vector<1x1x2x11xf32> to vector<2x11xf32>
    %13 = vector.shape_cast %10 : vector<2x11xf32> to vector<1x1x2x11xf32>
    tpu.vector_store %arg5[%c0_10, %c0_11, %c0_12, %c0_13], %13 {strides = array<i32>} : memref<3x1x2x11xf32, #tpu.memory_space<vmem>>, vector<1x1x2x11xf32>,
    %14 = vector.extract_strided_slice %3 {offsets = [0, 0, 0], sizes = [2, 10, 256], strides = [1, 1, 1]} : vector<2x11x256xf32> to vector<2x10x256xf32>
    %15 = vector.extract_strided_slice %3 {offsets = [0, 1, 0], sizes = [2, 10, 256], strides = [1, 1, 1]} : vector<2x11x256xf32> to vector<2x10x256xf32>
    %16 = arith.subf %14, %15 : vector<2x10x256xf32>
    %17 = vector.extract_strided_slice %4 {offsets = [0, 0, 0], sizes = [2, 10, 256], strides = [1, 1, 1]} : vector<2x11x256xf32> to vector<2x10x256xf32>
    %18 = vector.extract_strided_slice %4 {offsets = [0, 1, 0], sizes = [2, 10, 256], strides = [1, 1, 1]} : vector<2x11x256xf32> to vector<2x10x256xf32>
    %19 = arith.subf %17, %18 : vector<2x10x256xf32>
    %c1 = arith.constant 1 : index
    %c0_14 = arith.constant 0 : index
    %c0_15 = arith.constant 0 : index
    %c0_16 = arith.constant 0 : index
    %20 = vector.load %arg5[%c1, %c0_14, %c0_15, %c0_16] : memref<3x1x2x11xf32, #tpu.memory_space<vmem>>, vector<1x1x2x10xf32>
    %21 = vector.shape_cast %20 : vector<1x1x2x10xf32> to vector<2x10xf32>
    %22 = arith.mulf %16, %16 : vector<2x10x256xf32>
    %cst_17 = arith.constant dense<0.000000e+00> : vector<2x10xf32>
    %23 = vector.multi_reduction <add>, %22, %cst_17 [2] : vector<2x10x256xf32> to vector<2x10xf32>
    %24 = arith.addf %21, %23 : vector<2x10xf32>
    %c1_18 = arith.constant 1 : index
    %c0_19 = arith.constant 0 : index
    %c0_20 = arith.constant 0 : index
    %c0_21 = arith.constant 0 : index
    %25 = vector.load %arg5[%c1_18, %c0_19, %c0_20, %c0_21] : memref<3x1x2x11xf32, #tpu.memory_space<vmem>>, vector<1x1x2x10xf32>
    %26 = vector.shape_cast %25 : vector<1x1x2x10xf32> to vector<2x10xf32>
    %27 = vector.shape_cast %24 : vector<2x10xf32> to vector<1x1x2x10xf32>
    tpu.vector_store %arg5[%c1_18, %c0_19, %c0_20, %c0_21], %27 {strides = array<i32>} : memref<3x1x2x11xf32, #tpu.memory_space<vmem>>, vector<1x1x2x10xf32>,
    %c2 = arith.constant 2 : index
    %c0_22 = arith.constant 0 : index
    %c0_23 = arith.constant 0 : index
    %c0_24 = arith.constant 0 : index
    %28 = vector.load %arg5[%c2, %c0_22, %c0_23, %c0_24] : memref<3x1x2x11xf32, #tpu.memory_space<vmem>>, vector<1x1x2x10xf32>
    %29 = vector.shape_cast %28 : vector<1x1x2x10xf32> to vector<2x10xf32>
    %30 = arith.mulf %19, %19 : vector<2x10x256xf32>
    %cst_25 = arith.constant dense<0.000000e+00> : vector<2x10xf32>
    %31 = vector.multi_reduction <add>, %30, %cst_25 [2] : vector<2x10x256xf32> to vector<2x10xf32>
    %32 = arith.addf %29, %31 : vector<2x10xf32>
    %c2_26 = arith.constant 2 : index
    %c0_27 = arith.constant 0 : index
    %c0_28 = arith.constant 0 : index
    %c0_29 = arith.constant 0 : index
    %33 = vector.load %arg5[%c2_26, %c0_27, %c0_28, %c0_29] : memref<3x1x2x11xf32, #tpu.memory_space<vmem>>, vector<1x1x2x10xf32>
    %34 = vector.shape_cast %33 : vector<1x1x2x10xf32> to vector<2x10xf32>
    %35 = vector.shape_cast %32 : vector<2x10xf32> to vector<1x1x2x10xf32>
    tpu.vector_store %arg5[%c2_26, %c0_27, %c0_28, %c0_29], %35 {strides = array<i32>} : memref<3x1x2x11xf32, #tpu.memory_space<vmem>>, vector<1x1x2x10xf32>,
    return
  }
  func.func @transform_0(%arg0: i32, %arg1: i32, %arg2: i32) -> (i32, i32, i32) {
    %c1_i32 = arith.constant 1 : i32
    %0 = arith.muli %arg1, %c1_i32 : i32
    %1 = arith.addi %0, %arg2 : i32
    %c0_i32 = arith.constant 0 : i32
    %c0_i32_0 = arith.constant 0 : i32
    return %arg0, %c0_i32, %1 : i32, i32, i32
  }
  func.func @transform_1(%arg0: i32, %arg1: i32, %arg2: i32) -> (i32, i32, i32) {
    %c1_i32 = arith.constant 1 : i32
    %0 = arith.muli %arg1, %c1_i32 : i32
    %1 = arith.addi %0, %arg2 : i32
    %c0_i32 = arith.constant 0 : i32
    %c0_i32_0 = arith.constant 0 : i32
    return %arg0, %c0_i32, %1 : i32, i32, i32
  }
  func.func @transform_2(%arg0: i32, %arg1: i32, %arg2: i32) -> (i32, i32, i32, i32) {
    %c1_i32 = arith.constant 1 : i32
    %0 = arith.muli %arg0, %c1_i32 : i32
    %1 = arith.addi %0, %arg1 : i32
    %c0_i32 = arith.constant 0 : i32
    %c0_i32_0 = arith.constant 0 : i32
    %c0_i32_1 = arith.constant 0 : i32
    %c0_i32_2 = arith.constant 0 : i32
    return %c0_i32, %1, %c0_i32_0, %c0_i32_1 : i32, i32, i32, i32
  }
}

</mosaic_0001>

<llo_original>
// kernel: posi_loss.1
$region0: #{posi_loss.1}
  #allocation0 [shape = 'u32[]', space=smem, size = 0x4, offset = 0x4, fixed_abs, tag = 'smem constant byte address 0x4 - core index']
  #allocation1 [shape = 'u32[144,128]{1,0:T(1,128)}', space=vmem, size = 0x12000, scoped, tag = 'internal scratch']
  %s0 = inlined_call_operand.vmem [shape: f32[2,11,256], index: 0, kind: input, shape index: {}]
  %s1 = inlined_call_operand.vmem [shape: f32[2,11,256], index: 1, kind: input, shape index: {}]
  %s2 = inlined_call_operand.vmem [shape: f32[3,1,2,11], index: 2, kind: output, shape index: {}]
  %s3 = sld [smem:[#allocation0]]
  $region22: #{posi_loss.1} parent=0
    _
  %s5 = ssub.s32 1, %s3
  %s6 = scalar_select 0, %s5, %s3
  // Predicated region
  $region2: #{posi_loss.1} parent=0 // pred_check
    _
  $region3: #{posi_loss.1} parent=0 // pred_check_branch
    %8 = sbr.rel (0) target = $region5
  $region4: #{posi_loss.1} parent=0 // pred_region
    %s9 = sadd.s32 0, 0
    %s10 = smul.u32 2, %s9
    %p11 = scmp.lt.s32.totalorder %s10, 1
    %s12 = scalar_select %p11, %s10, 1
    %s13 = smul.addr %s12, 8
    %s14 = scalar_lea.vmem %s0, %s13
    %s15 = sadd.s32 0, 0
    %s16 = smul.u32 2, %s15
  $region5: #{posi_loss.1} parent=0 // pred_fallthru
    _
  // Predicated region
  $region6: #{posi_loss.1} parent=0 // pred_check
    _
  $region7: #{posi_loss.1} parent=0 // pred_check_branch
    %18 = sbr.rel (0) target = $region9
  $region8: #{posi_loss.1} parent=0 // pred_region
    %s19 = sadd.s32 0, 0
    %s20 = smul.u32 2, %s19
    %p21 = scmp.lt.s32.totalorder %s20, 1
    %s22 = scalar_select %p21, %s20, 1
    %s23 = smul.addr %s22, 8
    %s24 = scalar_lea.vmem %s1, %s23
    %s25 = sadd.s32 0, 0
    %s26 = smul.u32 2, %s25
  $region9: #{posi_loss.1} parent=0 // pred_fallthru
    _
  %s27 = sadd.s32 0, 0
  %s28 = smul.u32 2, %s27
  %p29 = scmp.lt.s32.totalorder %s28, 1
  %s30 = scalar_select %p29, %s28, 1
  %s31 = smul.addr %s30, 8
  %s32 = scalar_lea.vmem %s0, %s31
  %s33 = sadd.s32 0, 0
  %s34 = smul.u32 2, %s33
  %p35 = scmp.lt.s32.totalorder %s34, 1
  %s36 = scalar_select %p35, %s34, 1
  %s37 = smul.addr %s36, 8
  %s38 = scalar_lea.vmem %s1, %s37
  %s39 = sadd.s32 0, 0
  %p40 = scmp.lt.s32.totalorder %s39, 0
  %s41 = scalar_select %p40, %s39, 0
  %s42 = smul.addr %s41, 2
  %s43 = scalar_lea.vmem %s2, %s42
  %s44 = sadd.s32 0, 0
  %s45 = smul.u32 2, %s44
  %p46 = scmp.lt.s32.totalorder %s45, 1
  %s47 = scalar_select %p46, %s45, 1
  %s48 = smul.addr %s47, 8
  %s49 = scalar_lea.vmem %s0, %s48
  %s50 = sadd.s32 0, 0
  %s51 = smul.u32 2, %s50
  %s52 = sadd.s32 0, 0
  %s53 = smul.u32 2, %s52
  %p54 = scmp.lt.s32.totalorder %s53, 1
  %s55 = scalar_select %p54, %s53, 1
  %s56 = smul.addr %s55, 8
  %s57 = scalar_lea.vmem %s1, %s56
  %s58 = sadd.s32 0, 0
  %s59 = smul.u32 2, %s58
  %s60 = sadd.s32 0, 0
  %p61 = scmp.lt.s32.totalorder %s60, 0
  %s62 = scalar_select %p61, %s60, 0
  %s63 = smul.addr %s62, 2
  %s64 = scalar_lea.vmem %s2, %s63
  %s65 = sadd.s32 0, 0
  %p66 = scmp.eq.s32.totalorder 0, 0
  // Predicated region
  $region10: #{posi_loss.1} parent=0 // pred_check
    %p67 = pneg %p66
  $region11: #{posi_loss.1} parent=0 // pred_check_branch
    %69 = sbr.rel (%p67) target = $region13
  $region12: #{posi_loss.1} parent=0 // pred_region
    %vm70 = vcmask 82944
    %71 = vst.msk [vmem:[%s64] sm:$0x3] %vm70, 0.0
    %72 = vst.msk [vmem:[%s64 + $0x2] sm:$0x3] %vm70, 0.0
    %73 = vst.msk [vmem:[%s64 + $0x4] sm:$0x3] %vm70, 0.0
  $region13: #{posi_loss.1} parent=0 // pred_fallthru
    _
  %v74 = vld [vmem:[%s49] sm:$0xff]
  %v75 = vld [vmem:[%s49 + $0x8] sm:$0xff]
  %v76 = vld [vmem:[%s49 + $0x10] sm:$0x7]
  %v77 = vld [vmem:[%s49 + $0x18] sm:$0x7]
  %v78 = vld [vmem:[%s49 + $0x20] sm:$0xff]
  %v79 = vld [vmem:[%s49 + $0x28] sm:$0xff]
  %v80 = vld [vmem:[%s49 + $0x30] sm:$0x7]
  %v81 = vld [vmem:[%s49 + $0x38] sm:$0x7]
  %v82 = vld [vmem:[%s57] sm:$0xff]
  %v83 = vld [vmem:[%s57 + $0x8] sm:$0xff]
  %v84 = vld [vmem:[%s57 + $0x10] sm:$0x7]
  %v85 = vld [vmem:[%s57 + $0x18] sm:$0x7]
  %v86 = vld [vmem:[%s57 + $0x20] sm:$0xff]
  %v87 = vld [vmem:[%s57 + $0x28] sm:$0xff]
  %v88 = vld [vmem:[%s57 + $0x30] sm:$0x7]
  %v89 = vld [vmem:[%s57 + $0x38] sm:$0x7]
  %v90 = vsub.f32 %v74, %v82
  %v91 = vsub.f32 %v75, %v83
  %v92 = vsub.f32 %v76, %v84
  %v93 = vsub.f32 %v77, %v85
  %v94 = vsub.f32 %v78, %v86
  %v95 = vsub.f32 %v79, %v87
  %v96 = vsub.f32 %v80, %v88
  %v97 = vsub.f32 %v81, %v89
  %v98 = vld [vmem:[%s64] sm:$0x3]
  %v99 = vmul.f32 %v90, %v90
  %v100 = vmul.f32 %v91, %v91
  %v101 = vmul.f32 %v92, %v92
  %v102 = vmul.f32 %v93, %v93
  %v103 = vmul.f32 %v94, %v94
  %v104 = vmul.f32 %v95, %v95
  %v105 = vmul.f32 %v96, %v96
  %v106 = vmul.f32 %v97, %v97
  %v107 = vadd.f32 %v99, %v100
  %108 = vadd.xlane.f32.xlu0 %v107
  %v109 = vpop.xlane.xlu0 %108
  %vm110 = vcmask 1042432
  %v111 = vsel %vm110, %v101, 0.0
  %v112 = vsel %vm110, %v102, 0.0
  %v113 = vadd.f32 %v111, %v112
  %114 = vadd.xlane.f32.xlu0 %v113
  %v115 = vpop.xlane.xlu0 %114
  %v116 = vadd.f32 %v103, %v104
  %117 = vadd.xlane.f32.xlu0 %v116
  %v118 = vpop.xlane.xlu0 %117
  %v119 = vsel %vm110, %v105, 0.0
  %v120 = vsel %vm110, %v106, 0.0
  %v121 = vadd.f32 %v119, %v120
  %122 = vadd.xlane.f32.xlu0 %v121
  %v123 = vpop.xlane.xlu0 %122
  %v128 = vlaneseq
  %v129 = vand.u32 %v128, 127
  %v130 = vlaneseq
  %v131 = vshrl.u32 %v130, 7
  %v132 = vsub.s32 %v129, %v131
  %v133 = vrot.slane %v109, %v132
  %v134 = vadd.s32 %v129, 4294967288
  %v135 = vlaneseq
  %v136 = vshrl.u32 %v135, 7
  %v137 = vsub.s32 %v134, %v136
  %v138 = vrot.slane %v115, %v137
  %vm139 = vcmask 130112
  %v140 = vsel %vm139, %v138, %v133
  %v141 = vlaneseq
  %v142 = vshrl.u32 %v141, 7
  %v143 = vsub.s32 %v129, %v142
  %v144 = vrot.slane %v118, %v143
  %v145 = vlaneseq
  %v146 = vshrl.u32 %v145, 7
  %v147 = vsub.s32 %v134, %v146
  %v148 = vrot.slane %v123, %v147
  %v149 = vsel %vm139, %v148, %v144
  %vm150 = vcmask 1041409
  %v151 = vsel %vm150, %v149, %v140
  %v153 = vadd.f32 %v98, %v151
  %vm154 = vcmask 82944
  %155 = vst.msk [vmem:[%s64] sm:$0x3] %vm154, %v153
  %vm164 = vcmask 1046528
  %v165 = vrot.slane %v74, 1
  %v166 = vrot.slane %v76, 1
  %v167 = vsel %vm164, %v165, %v166
  %v168 = vrot.slane %v75, 1
  %v169 = vrot.slane %v77, 1
  %v170 = vsel %vm164, %v168, %v169
  %v171 = vrot.slane %v78, 1
  %v172 = vrot.slane %v80, 1
  %v173 = vsel %vm164, %v171, %v172
  %v174 = vrot.slane %v79, 1
  %v175 = vrot.slane %v81, 1
  %v176 = vsel %vm164, %v174, %v175
  %v185 = vsub.f32 %v74, %v167
  %v186 = vsub.f32 %v75, %v170
  %v187 = vsub.f32 %v76, %v166
  %v188 = vsub.f32 %v77, %v169
  %v189 = vsub.f32 %v78, %v173
  %v190 = vsub.f32 %v79, %v176
  %v191 = vsub.f32 %v80, %v172
  %v192 = vsub.f32 %v81, %v175
  %v201 = vrot.slane %v82, 1
  %v202 = vrot.slane %v84, 1
  %v203 = vsel %vm164, %v201, %v202
  %v204 = vrot.slane %v83, 1
  %v205 = vrot.slane %v85, 1
  %v206 = vsel %vm164, %v204, %v205
  %v207 = vrot.slane %v86, 1
  %v208 = vrot.slane %v88, 1
  %v209 = vsel %vm164, %v207, %v208
  %v210 = vrot.slane %v87, 1
  %v211 = vrot.slane %v89, 1
  %v212 = vsel %vm164, %v210, %v211
  %v221 = vsub.f32 %v82, %v203
  %v222 = vsub.f32 %v83, %v206
  %v223 = vsub.f32 %v84, %v202
  %v224 = vsub.f32 %v85, %v205
  %v225 = vsub.f32 %v86, %v209
  %v226 = vsub.f32 %v87, %v212
  %v227 = vsub.f32 %v88, %v208
  %v228 = vsub.f32 %v89, %v211
  %s229 = scalar_lea.vmem %s64, 2
  %v230 = vld [vmem:[%s229] sm:$0x3]
  %v231 = vmul.f32 %v185, %v185
  %v232 = vmul.f32 %v186, %v186
  %v233 = vmul.f32 %v187, %v187
  %v234 = vmul.f32 %v188, %v188
  %v235 = vmul.f32 %v189, %v189
  %v236 = vmul.f32 %v190, %v190
  %v237 = vmul.f32 %v191, %v191
  %v238 = vmul.f32 %v192, %v192
  %v239 = vadd.f32 %v231, %v232
  %240 = vadd.xlane.f32.xlu0 %v239
  %v241 = vpop.xlane.xlu0 %240
  %vm242 = vcmask 1041408
  %v243 = vsel %vm242, %v233, 0.0
  %v244 = vsel %vm242, %v234, 0.0
  %v245 = vadd.f32 %v243, %v244
  %246 = vadd.xlane.f32.xlu0 %v245
  %v247 = vpop.xlane.xlu0 %246
  %v248 = vadd.f32 %v235, %v236
  %249 = vadd.xlane.f32.xlu0 %v248
  %v250 = vpop.xlane.xlu0 %249
  %v251 = vsel %vm242, %v237, 0.0
  %v252 = vsel %vm242, %v238, 0.0
  %v253 = vadd.f32 %v251, %v252
  %254 = vadd.xlane.f32.xlu0 %v253
  %v255 = vpop.xlane.xlu0 %254
  %v260 = vlaneseq
  %v261 = vshrl.u32 %v260, 7
  %v262 = vsub.s32 %v129, %v261
  %v263 = vrot.slane %v241, %v262
  %v264 = vlaneseq
  %v265 = vshrl.u32 %v264, 7
  %v266 = vsub.s32 %v134, %v265
  %v267 = vrot.slane %v247, %v266
  %v268 = vsel %vm139, %v267, %v263
  %v269 = vlaneseq
  %v270 = vshrl.u32 %v269, 7
  %v271 = vsub.s32 %v129, %v270
  %v272 = vrot.slane %v250, %v271
  %v273 = vlaneseq
  %v274 = vshrl.u32 %v273, 7
  %v275 = vsub.s32 %v134, %v274
  %v276 = vrot.slane %v255, %v275
  %v277 = vsel %vm139, %v276, %v272
  %v278 = vsel %vm150, %v277, %v268
  %v280 = vadd.f32 %v230, %v278
  %vm281 = vcmask 74752
  %282 = vst.msk [vmem:[%s229] sm:$0x3] %vm281, %v280
  %s283 = scalar_lea.vmem %s64, 4
  %v284 = vld [vmem:[%s283] sm:$0x3]
  %v285 = vmul.f32 %v221, %v221
  %v286 = vmul.f32 %v222, %v222
  %v287 = vmul.f32 %v223, %v223
  %v288 = vmul.f32 %v224, %v224
  %v289 = vmul.f32 %v225, %v225
  %v290 = vmul.f32 %v226, %v226
  %v291 = vmul.f32 %v227, %v227
  %v292 = vmul.f32 %v228, %v228
  %v293 = vadd.f32 %v285, %v286
  %294 = vadd.xlane.f32.xlu0 %v293
  %v295 = vpop.xlane.xlu0 %294
  %v296 = vsel %vm242, %v287, 0.0
  %v297 = vsel %vm242, %v288, 0.0
  %v298 = vadd.f32 %v296, %v297
  %299 = vadd.xlane.f32.xlu0 %v298
  %v300 = vpop.xlane.xlu0 %299
  %v301 = vadd.f32 %v289, %v290
  %302 = vadd.xlane.f32.xlu0 %v301
  %v303 = vpop.xlane.xlu0 %302
  %v304 = vsel %vm242, %v291, 0.0
  %v305 = vsel %vm242, %v292, 0.0
  %v306 = vadd.f32 %v304, %v305
  %307 = vadd.xlane.f32.xlu0 %v306
  %v308 = vpop.xlane.xlu0 %307
  %v313 = vlaneseq
  %v314 = vshrl.u32 %v313, 7
  %v315 = vsub.s32 %v129, %v314
  %v316 = vrot.slane %v295, %v315
  %v317 = vlaneseq
  %v318 = vshrl.u32 %v317, 7
  %v319 = vsub.s32 %v134, %v318
  %v320 = vrot.slane %v300, %v319
  %v321 = vsel %vm139, %v320, %v316
  %v322 = vlaneseq
  %v323 = vshrl.u32 %v322, 7
  %v324 = vsub.s32 %v129, %v323
  %v325 = vrot.slane %v303, %v324
  %v326 = vlaneseq
  %v327 = vshrl.u32 %v326, 7
  %v328 = vsub.s32 %v134, %v327
  %v329 = vrot.slane %v308, %v328
  %v330 = vsel %vm139, %v329, %v325
  %v331 = vsel %vm150, %v330, %v321
  %v333 = vadd.f32 %v284, %v331
  %334 = vst.msk [vmem:[%s283] sm:$0x3] %vm281, %v333
  %s335 = sadd.s32 0, 0
  %p336 = scmp.lt.s32.totalorder %s335, 0
  %s337 = scalar_select %p336, %s335, 0
  %s338 = smul.addr %s337, 2
  %s339 = scalar_lea.vmem %s2, %s338
  // Predicated region
  $region14: #{posi_loss.1} parent=0 // pred_check
    _
  $region15: #{posi_loss.1} parent=0 // pred_check_branch
    %341 = sbr.rel (0) target = $region17
  $region16: #{posi_loss.1} parent=0 // pred_region
    %s342 = sadd.s32 0, 0
  $region17: #{posi_loss.1} parent=0 // pred_fallthru
    _
  // Predicated region
  $region18: #{posi_loss.1} parent=0 // pred_check
    _
  $region19: #{posi_loss.1} parent=0 // pred_check_branch
    %344 = sbr.rel (0) target = $region21
  $region20: #{posi_loss.1} parent=0 // pred_region
    %s345 = sadd.s32 0, 0
    %p346 = scmp.lt.s32.totalorder %s345, 0
    %s347 = scalar_select %p346, %s345, 0
    %s348 = smul.addr %s347, 2
    %s349 = scalar_lea.vmem %s2, %s348
  $region21: #{posi_loss.1} parent=0 // pred_fallthru
    _

</llo_original>
